<compile_context>
chip_gen: v5e
topology: v5e:2x2
jax: 0.10.0
libtpu: 0.0.40
codegen_flags: <defaults>
</compile_context>

<pallas_src>
import functools

import jax
import jax.numpy as jnp
from jax import lax
from jax.experimental import pallas as pl
from jax.experimental.pallas import tpu as pltpu


def _cdiv(a, b):
    return (a + b - 1) // b


def _round_up(x, m):
    return ((x + m - 1) // m) * m


def _focal_loss_kernel(x_ref, t_ref, o_ref, *, gamma, n, tile_n):
    i = pl.program_id(0)

    x = x_ref[...].astype(jnp.float32)                                   # (TN, C)
    t = t_ref[...]                                                       # (TN, 1) int32

    # Numerically stable softmax pieces.  exp(x - m) is reused for both the
    # denominator S and the target-class numerator e_t, so no per-row exp(-ce).
    m = jnp.max(x, axis=-1, keepdims=True)                               # (TN, 1)
    e = jnp.exp(x - m)                                                   # (TN, C)  EUP
    s = jnp.sum(e, axis=-1, keepdims=True)                               # (TN, 1)  XLU

    cls_idx = lax.broadcasted_iota(jnp.int32, x.shape, 1)                # (TN, C)
    onehot = cls_idx == t
    x_t = jnp.sum(jnp.where(onehot, x, 0.0), axis=-1, keepdims=True)     # (TN, 1)
    e_t = jnp.sum(jnp.where(onehot, e, 0.0), axis=-1, keepdims=True)     # (TN, 1)

    ce = jnp.maximum(jnp.log(s) + m - x_t, 0.0)    # clamp tiny fp-negative ce
    pt = e_t / s                                   # == exp(-ce), exact, no extra exp
    base = 1.0 - pt

    gamma_i = int(gamma)
    if float(gamma) == float(gamma_i) and gamma_i >= 0:
        # Integer gamma (module default gamma=2): repeated multiply, start at base.
        if gamma_i == 0:
            w = jnp.ones_like(base)
        else:
            w = base
            for _ in range(gamma_i - 1):
                w = w * base
    else:
        w = jnp.power(jnp.maximum(base, 0.0), float(gamma))

    # Mask rows past N (garbage read by the ragged last block) with a select so
    # NaN/Inf from garbage never propagates, then reduce the tile to a scalar.
    row = lax.broadcasted_iota(jnp.int32, (tile_n, 1), 0) + i * tile_n   # (TN, 1)
    vals = jnp.where(row < n, w * ce, 0.0)                               # (TN, 1)
    tile_sum = jnp.sum(vals, axis=0, keepdims=True)                      # (1, 1)

    # Lane-dense, (8,128)-aligned per-tile partial sum: a single unmasked vst and
    # a tiny 4 KiB writeback per grid step.
    o_ref[...] = jnp.broadcast_to(tile_sum, o_ref.shape)


def focal_loss(inputs, targets, *, gamma=2.0, tile_n=None, vmem_limit_bytes=None):
    """Pallas focal loss.

    inputs:  (N, C) float logits (f32 or bf16).
    targets: (N,)   integer class ids (must be in [0, C); no ignore_index).
    Returns scalar mean focal loss (matches FocalLoss(alpha=None, gamma).forward).
    """
    n, c = inputs.shape
    itemsize = jnp.dtype(inputs.dtype).itemsize
    # Sublane packing for the logits dtype (f32->8, bf16->16, int8/fp8->32 rows).
    sub = {4: 8, 2: 16, 1: 32}.get(itemsize, 8)

    # Guard: even a minimal (sub, C) block must fit comfortably (f32 temps incl.)
    # inside v7x's 64 MiB VMEM once double-buffered.
    if sub * c * 4 > 8 * 1024 * 1024:
        raise NotImplementedError(
            f"focal_loss Pallas kernel: C={c} is too large for a single-pass row "
            "tile; needs a C grid axis with an online logsumexp.")

    if tile_n is None:
        # ~4 MiB logits blocks: per-step overhead (~0.35us) becomes negligible and
        # DMA granularity sits at the measured HBM-roofline plateau.
        target_block_bytes = 4 * 1024 * 1024
        tile_n = max(sub, target_block_bytes // max(c * itemsize, 1))
    # Keep >= ~8 grid steps when the batch allows it (v7x megacore sharding of the
    # "parallel" axis + pipelining slack), without dropping below one sublane pack.
    tile_n = min(tile_n, _round_up(_cdiv(n, 8), sub))
    tile_n = max(sub, (tile_n // sub) * sub)

    num_tiles = _cdiv(n, tile_n)

    if vmem_limit_bytes is None:
        in_block = tile_n * c * itemsize                 # logits block (input dtype)
        tgt_block = tile_n * 4                           # int32 targets block
        out_block = 8 * 128 * 4                          # partial-sum block
        f32_tmps = 3 * tile_n * c * 4                    # x, e, where temporaries
        derived = 2 * (in_block + tgt_block + out_block) + f32_tmps + 4 * 1024 * 1024
        vmem_limit_bytes = int(min(max(derived, 16 * 1024 * 1024), 56 * 1024 * 1024))

    t = targets.astype(jnp.int32).reshape(n, 1)

    kernel = functools.partial(_focal_loss_kernel, gamma=float(gamma), n=n,
                               tile_n=tile_n)

    partial_sums = pl.pallas_call(
        kernel,
        out_shape=jax.ShapeDtypeStruct((num_tiles * 8, 128), jnp.float32),
        grid_spec=pltpu.PrefetchScalarGridSpec(
            num_scalar_prefetch=0,
            grid=(num_tiles,),
            in_specs=[
                pl.BlockSpec((tile_n, c), lambda i: (i, 0)),   # logits tile
                pl.BlockSpec((tile_n, 1), lambda i: (i, 0)),   # target ids tile
            ],
            out_specs=pl.BlockSpec((8, 128), lambda i: (i, 0)),
        ),
        compiler_params=pltpu.CompilerParams(
            # Each grid step owns a distinct, aligned output block -> fully
            # parallel (v7x shards the row axis across both TensorCores).
            dimension_semantics=("parallel",),
            vmem_limit_bytes=vmem_limit_bytes,
        ),
    )(inputs, t)

    # Tiny final reduction over num_tiles scalars (each block is a splat of its
    # tile's partial sum).
    partials = partial_sums.reshape(num_tiles, 8, 128)[:, 0, 0]
    return jnp.sum(partials) / jnp.float32(n)


def _focal_loss_ref(inputs, targets, gamma=2.0):
    """Pure-JAX reference mirroring torch F.cross_entropy(reduction='none') + focal."""
    logp = jax.nn.log_softmax(inputs.astype(jnp.float32), axis=-1)
    ce = -jnp.take_along_axis(logp, targets[:, None].astype(jnp.int32), axis=-1)[:, 0]
    pt = jnp.exp(-ce)
    return jnp.mean(((1.0 - pt) ** gamma) * ce)


if __name__ == "__main__":
    key = jax.random.PRNGKey(0)
    k1, k2, k3, k4 = jax.random.split(key, 4)

    gamma = 2.0  # FocalLoss(alpha=None, gamma=2)

    # Primary small demo: 16 samples x 32 classes, f32 logits.
    N, C = 16, 32
    logits = jax.random.normal(k1, (N, C), dtype=jnp.float32)
    targets = jax.random.randint(k2, (N,), 0, C, dtype=jnp.int32)
    loss = jax.block_until_ready(focal_loss(logits, targets, gamma=gamma))
    ref = _focal_loss_ref(logits, targets, gamma=gamma)
    assert jnp.allclose(loss, ref, rtol=1e-4, atol=1e-6), (loss, ref)

    # Secondary check: non-multiple-of-tile batch + bf16 logits (ragged-tail mask
    # + cast path, no wrapper-side padding of the logits).
    N2, C2 = 19, 40
    logits2 = jax.random.normal(k3, (N2, C2), dtype=jnp.bfloat16)
    targets2 = jax.random.randint(k4, (N2,), 0, C2, dtype=jnp.int32)
    loss2 = jax.block_until_ready(focal_loss(logits2, targets2, gamma=gamma))
    ref2 = _focal_loss_ref(logits2.astype(jnp.float32), targets2, gamma=gamma)
    assert jnp.allclose(loss2, ref2, rtol=1e-4, atol=1e-5), (loss2, ref2)

    print("KERNEL_OK")
</pallas_src>

<mosaic_0001>
module attributes {stable_mosaic.version = 11 : i64} {
  func.func @_focal_loss_kernel(%arg0: i32, %arg1: memref<8x32xf32, #tpu.memory_space<vmem>>, %arg2: memref<8x1xi32, #tpu.memory_space<vmem>>, %arg3: memref<8x128xf32, #tpu.memory_space<vmem>>) attributes {dimension_semantics = [#tpu.dimension_semantics<parallel>], iteration_bounds = array<i64: 2>, scalar_prefetch = 0 : i64, scratch_operands = 0 : i64, tpu.core_type = #tpu.core_type<tc>, window_params = [{transform_indices = @transform_0, window_bounds = array<i64: 8, 32>}, {transform_indices = @transform_1, window_bounds = array<i64: 8, 1>}, {transform_indices = @transform_2, window_bounds = array<i64: 8, 128>}]} {
    %c0 = arith.constant 0 : index
    %c0_0 = arith.constant 0 : index
    %0 = vector.load %arg1[%c0, %c0_0] : memref<8x32xf32, #tpu.memory_space<vmem>>, vector<8x32xf32>
    %c0_1 = arith.constant 0 : index
    %c0_2 = arith.constant 0 : index
    %1 = vector.load %arg2[%c0_1, %c0_2] : memref<8x1xi32, #tpu.memory_space<vmem>>, vector<8x1xi32>
    %cst = arith.constant dense<0xFF800000> : vector<8xf32>
    %2 = vector.multi_reduction <maximumf>, %0, %cst [1] : vector<8x32xf32> to vector<8xf32>
    %3 = vector.shape_cast %2 : vector<8xf32> to vector<8x1xf32>
    %4 = vector.broadcast %3 : vector<8x1xf32> to vector<8x32xf32>
    %5 = arith.subf %0, %4 : vector<8x32xf32>
    %6 = math.exp %5 : vector<8x32xf32>
    %cst_3 = arith.constant dense<0.000000e+00> : vector<8xf32>
    %7 = vector.multi_reduction <add>, %6, %cst_3 [1] : vector<8x32xf32> to vector<8xf32>
    %8 = vector.shape_cast %7 : vector<8xf32> to vector<8x1xf32>
    %9 = tpu.iota {dimensions = array<i32: 1>} : vector<8x32xi32>
    %10 = vector.broadcast %1 : vector<8x1xi32> to vector<8x32xi32>
    %11 = arith.cmpi eq, %9, %10 : vector<8x32xi32>
    %cst_4 = arith.constant 0.000000e+00 : f32
    %12 = vector.broadcast %cst_4 : f32 to vector<8x32xf32>
    %13 = arith.select %11, %0, %12 : vector<8x32xi1>, vector<8x32xf32>
    %cst_5 = arith.constant dense<0.000000e+00> : vector<8xf32>
    %14 = vector.multi_reduction <add>, %13, %cst_5 [1] : vector<8x32xf32> to vector<8xf32>
    %15 = vector.shape_cast %14 : vector<8xf32> to vector<8x1xf32>
    %cst_6 = arith.constant 0.000000e+00 : f32
    %16 = vector.broadcast %cst_6 : f32 to vector<8x32xf32>
    %17 = arith.select %11, %6, %16 : vector<8x32xi1>, vector<8x32xf32>
    %cst_7 = arith.constant dense<0.000000e+00> : vector<8xf32>
    %18 = vector.multi_reduction <add>, %17, %cst_7 [1] : vector<8x32xf32> to vector<8xf32>
    %19 = vector.shape_cast %18 : vector<8xf32> to vector<8x1xf32>
    %20 = math.log %8 : vector<8x1xf32>
    %21 = arith.addf %20, %3 : vector<8x1xf32>
    %22 = arith.subf %21, %15 : vector<8x1xf32>
    %cst_8 = arith.constant 0.000000e+00 : f32
    %23 = vector.broadcast %cst_8 : f32 to vector<8x1xf32>
    %24 = arith.maximumf %22, %23 : vector<8x1xf32>
    %25 = arith.divf %19, %8 : vector<8x1xf32>
    %cst_9 = arith.constant 1.000000e+00 : f32
    %26 = vector.broadcast %cst_9 : f32 to vector<8x1xf32>
    %27 = arith.subf %26, %25 : vector<8x1xf32>
    %28 = arith.mulf %27, %27 : vector<8x1xf32>
    %29 = tpu.iota {dimensions = array<i32: 0>} : vector<8x1xi32>
    %c8_i32 = arith.constant 8 : i32
    %30 = arith.muli %arg0, %c8_i32 : i32
    %31 = vector.broadcast %30 : i32 to vector<8x1xi32>
    %32 = arith.addi %29, %31 : vector<8x1xi32>
    %c16_i32 = arith.constant 16 : i32
    %33 = vector.broadcast %c16_i32 : i32 to vector<8x1xi32>
    %34 = arith.cmpi slt, %32, %33 : vector<8x1xi32>
    %35 = arith.mulf %28, %24 : vector<8x1xf32>
    %cst_10 = arith.constant 0.000000e+00 : f32
    %36 = vector.broadcast %cst_10 : f32 to vector<8x1xf32>
    %37 = arith.select %34, %35, %36 : vector<8x1xi1>, vector<8x1xf32>
    %cst_11 = arith.constant dense<0.000000e+00> : vector<1xf32>
    %38 = vector.multi_reduction <add>, %37, %cst_11 [0] : vector<8x1xf32> to vector<1xf32>
    %39 = vector.shape_cast %38 : vector<1xf32> to vector<1x1xf32>
    %40 = vector.shape_cast %39 : vector<1x1xf32> to vector<1x1xf32>
    %41 = vector.broadcast %40 : vector<1x1xf32> to vector<8x128xf32>
    %c0_12 = arith.constant 0 : index
    %c0_13 = arith.constant 0 : index
    %42 = vector.load %arg3[%c0_12, %c0_13] : memref<8x128xf32, #tpu.memory_space<vmem>>, vector<8x128xf32>
    tpu.vector_store %arg3[%c0_12, %c0_13], %41 {strides = array<i32>} : memref<8x128xf32, #tpu.memory_space<vmem>>, vector<8x128xf32>,
    return
  }
  func.func @transform_0(%arg0: i32) -> (i32, i32) {
    %c0_i32 = arith.constant 0 : i32
    %c0_i32_0 = arith.constant 0 : i32
    return %arg0, %c0_i32 : i32, i32
  }
  func.func @transform_1(%arg0: i32) -> (i32, i32) {
    %c0_i32 = arith.constant 0 : i32
    %c0_i32_0 = arith.constant 0 : i32
    return %arg0, %c0_i32 : i32, i32
  }
  func.func @transform_2(%arg0: i32) -> (i32, i32) {
    %c0_i32 = arith.constant 0 : i32
    %c0_i32_0 = arith.constant 0 : i32
    return %arg0, %c0_i32 : i32, i32
  }
}

</mosaic_0001>

<llo_original>
// kernel: tpu_custom_call.1
$region0: #{tpu_custom_call.1}
  #allocation0 [shape = 'u32[]', space=smem, size = 0x4, offset = 0x4, fixed_abs, tag = 'smem constant byte address 0x4 - core index']
  #allocation1 [shape = 'u32[72,128]{1,0:T(1,128)}', space=vmem, size = 0x9000, scoped, tag = 'internal scratch']
  %s0 = inlined_call_operand.vmem [shape: f32[16,32], index: 0, kind: input, shape index: {}]
  %s1 = inlined_call_operand.vmem [shape: s32[16,1], index: 1, kind: input, shape index: {}]
  %s2 = inlined_call_operand.hbm [shape: f32[16,128], index: 2, kind: output, shape index: {}]
  %s3 = sld [smem:[#allocation0]]
  $region41: #{tpu_custom_call.1} parent=0
    _
  %s5 = ssub.s32 1, %s3
  %s6 = scalar_select 0, %s5, %s3
  $region1: #{tpu_custom_call.1} parent=0
    #allocation2 [shape = 'u8[8192]{0}', space=vmem, size = 0x2000, scoped, tag = 'output window, operand 0']
    #allocation3 [shape = 's32[2]{0}', space=sflag, size = 0x8, scoped, tag = 'scoped memory for tpu_custom_call.1']
    %7 = vsyncpa [#allocation3], 0
    %s8 = scalar_lea.sflag [#allocation3], 1
    %9 = vsyncpa %s8, 0
    loop: start=0, step=1, limit=4
    $region2: #{tpu_custom_call.1} parent=1 // loop_pre_header
      _
    $region3: #{tpu_custom_call.1} parent=1 // loop_header
      %s11 = sphi 0, %s15
      %p12 = scmp.ge.s32.totalorder %s11, 4
      %s21 = sphi 0, %s23
      %s24 = sphi 0, %s21
      %s25 = sphi 0, %s24
      %s41 = sphi 0, %s25
      %s47 = sphi 0, %s49
      %s50 = sphi 0, %s47
      %s51 = sphi 0, %s50
      %s67 = sphi 0, %s51
      %s73 = sphi 0, %s75
      %s76 = sphi 0, %s73
      %s77 = sphi 0, %s76
      %s93 = sphi 0, %s77
    $region4: #{tpu_custom_call.1} parent=1 // loop_header_branch
      %14 = sbr.rel (%p12) target = $region8
    $region5: #{tpu_custom_call.1} parent=1 // loop_body
      %s16 = ssub.s32 %s11, 1
      %s17 = ssub.s32 %s11, 2
      %s18 = sadd.s32 %s11, 1
      %s19 = ssub.s32 %s11, %s18
      %p20 = scmp.eq.s32.totalorder %s19, 0
      %s22 = sadd.s32 %s21, 1
      %s23 = scalar_select %p20, %s21, %s22
      %p26 = pneg %p20
      %p27 = scmp.eq.s32.totalorder %s11, 1
      %p28 = por %p26, %p27
      %p29 = scmp.ne.s32.totalorder %s21, %s24
      %p30 = scmp.eq.s32.totalorder %s11, 0
      %p31 = por %p29, %p30
      %p32 = scmp.ne.s32.totalorder %s21, %s24
      %p33 = scmp.eq.s32.totalorder %s16, 1
      %p34 = por %p32, %p33
      %p35 = scmp.ne.s32.totalorder %s24, %s25
      %p36 = scmp.eq.s32.totalorder %s16, 0
      %p37 = por %p35, %p36
      %p38 = scmp.ne.s32.totalorder %s24, %s25
      %p39 = scmp.eq.s32.totalorder %s17, 1
      %p40 = por %p38, %p39
      %p42 = scmp.ne.s32.totalorder %s25, %s41
      %p43 = scmp.eq.s32.totalorder %s17, 0
      %p44 = por %p42, %p43
      %s45 = ssub.s32 %s11, %s18
      %p46 = scmp.eq.s32.totalorder %s45, 0
      %s48 = sadd.s32 %s47, 1
      %s49 = scalar_select %p46, %s47, %s48
      %p52 = pneg %p46
      %p53 = scmp.eq.s32.totalorder %s11, 1
      %p54 = por %p52, %p53
      %p55 = scmp.ne.s32.totalorder %s47, %s50
      %p56 = scmp.eq.s32.totalorder %s11, 0
      %p57 = por %p55, %p56
      %p58 = scmp.ne.s32.totalorder %s47, %s50
      %p59 = scmp.eq.s32.totalorder %s16, 1
      %p60 = por %p58, %p59
      %p61 = scmp.ne.s32.totalorder %s50, %s51
      %p62 = scmp.eq.s32.totalorder %s16, 0
      %p63 = por %p61, %p62
      %p64 = scmp.ne.s32.totalorder %s50, %s51
      %p65 = scmp.eq.s32.totalorder %s17, 1
      %p66 = por %p64, %p65
      %p68 = scmp.ne.s32.totalorder %s51, %s67
      %p69 = scmp.eq.s32.totalorder %s17, 0
      %p70 = por %p68, %p69
      %s71 = ssub.s32 %s11, %s18
      %p72 = scmp.eq.s32.totalorder %s71, 0
      %s74 = sadd.s32 %s73, 1
      %s75 = scalar_select %p72, %s73, %s74
      %p78 = pneg %p72
      %p79 = scmp.eq.s32.totalorder %s11, 1
      %p80 = por %p78, %p79
      %p81 = scmp.ne.s32.totalorder %s73, %s76
      %p82 = scmp.eq.s32.totalorder %s11, 0
      %p83 = por %p81, %p82
      %p84 = scmp.ne.s32.totalorder %s73, %s76
      %p85 = scmp.eq.s32.totalorder %s16, 1
      %p86 = por %p84, %p85
      %p87 = scmp.ne.s32.totalorder %s76, %s77
      %p88 = scmp.eq.s32.totalorder %s16, 0
      %p89 = por %p87, %p88
      %p90 = scmp.ne.s32.totalorder %s76, %s77
      %p91 = scmp.eq.s32.totalorder %s17, 1
      %p92 = por %p90, %p91
      %p94 = scmp.ne.s32.totalorder %s77, %s93
      %p95 = scmp.eq.s32.totalorder %s17, 0
      %p96 = por %p94, %p95
      %p97 = scmp.le.s32.totalorder 1, %s11
      %p98 = scmp.lt.s32.totalorder %s11, 3
      %p99 = pnand %p97, %p98
      %p100 = pneg %p99
      // Predicated region
      $region9: #{tpu_custom_call.1} parent=5 // pred_check
        _
      $region10: #{tpu_custom_call.1} parent=5 // pred_check_branch
        %102 = sbr.rel (%p99) target = $region12
      $region11: #{tpu_custom_call.1} parent=5 // pred_region
        %s103 = ssub.s32 %s11, 1
      $region12: #{tpu_custom_call.1} parent=5 // pred_fallthru
        _
      %p104 = scmp.lt.s32.totalorder %s11, 2
      // Predicated region
      $region13: #{tpu_custom_call.1} parent=5 // pred_check
        %p105 = pneg %p104
      $region14: #{tpu_custom_call.1} parent=5 // pred_check_branch
        %107 = sbr.rel (%p105) target = $region16
      $region15: #{tpu_custom_call.1} parent=5 // pred_region
        // Predicated region
        $region17: #{tpu_custom_call.1} parent=15 // pred_check
          %p108 = pneg %p31
        $region18: #{tpu_custom_call.1} parent=15 // pred_check_branch
          %110 = sbr.rel (%p108) target = $region20
        $region19: #{tpu_custom_call.1} parent=15 // pred_region
          %p111 = scmp.lt.s32.totalorder %s11, 1
          %s112 = scalar_select %p111, %s11, 1
          %s113 = smul.addr %s112, 8
          %s114 = scalar_lea.vmem %s0, %s113
        $region20: #{tpu_custom_call.1} parent=15 // pred_fallthru
          _
        // Predicated region
        $region21: #{tpu_custom_call.1} parent=15 // pred_check
          %p115 = pneg %p57
        $region22: #{tpu_custom_call.1} parent=15 // pred_check_branch
          %117 = sbr.rel (%p115) target = $region24
        $region23: #{tpu_custom_call.1} parent=15 // pred_region
          %p118 = scmp.lt.s32.totalorder %s11, 1
          %s119 = scalar_select %p118, %s11, 1
          %s120 = smul.addr %s119, 8
          %s121 = scalar_lea.vmem %s1, %s120
        $region24: #{tpu_custom_call.1} parent=15 // pred_fallthru
          _
      $region16: #{tpu_custom_call.1} parent=5 // pred_fallthru
        _
      %p122 = scmp.le.s32.totalorder 1, %s11
      %p123 = scmp.lt.s32.totalorder %s11, 3
      %p124 = pnand %p122, %p123
      %p125 = pneg %p124
      // Predicated region
      $region25: #{tpu_custom_call.1} parent=5 // pred_check
        _
      $region26: #{tpu_custom_call.1} parent=5 // pred_check_branch
        %127 = sbr.rel (%p124) target = $region28
      $region27: #{tpu_custom_call.1} parent=5 // pred_region
        %s128 = ssub.s32 %s11, 1
        %p129 = scmp.lt.s32.totalorder %s16, 1
        %s130 = scalar_select %p129, %s16, 1
        %s131 = smul.addr %s130, 8
        %s132 = scalar_lea.vmem %s0, %s131
        %p133 = pneg %p37
        %p134 = pneg %p34
        %p135 = scmp.lt.s32.totalorder %s16, 1
        %s136 = scalar_select %p135, %s16, 1
        %s137 = smul.addr %s136, 8
        %s138 = scalar_lea.vmem %s1, %s137
        %p139 = pneg %p63
        %p140 = pneg %p60
        %p141 = pneg %p89
        %p142 = pneg %p86
        %s143 = sand.u32 %s76, 1
        %s144 = scalar_lea.sflag [#allocation3], %s143
        %s145 = sand.u32 %s76, 1
        %s146 = smul.addr %s145, 8
        %s147 = scalar_lea.vmem [#allocation2], %s146
        %p148 = scmp.lt.s32.totalorder %s16, 1
        %s149 = scalar_select %p148, %s16, 1
        %s150 = smul.addr %s149, 8
        %s151 = scalar_lea.vmem %s0, %s150
        %p152 = scmp.lt.s32.totalorder %s16, 1
        %s153 = scalar_select %p152, %s16, 1
        %s154 = smul.addr %s153, 8
        %s155 = scalar_lea.vmem %s1, %s154
        %v156 = vld [vmem:[%s151] sm:$0xff]
        %v157 = vld [vmem:[%s155] sm:$0xff]
        %vm158 = vcmask 261120
        %v159 = vsel %vm158, %v156, -inf
        %160 = vmax.xlane.f32.xlu0 %v159
        %v161 = vpop.xlane.xlu0 %160
        %v162 = vsub.f32 %v156, %v161
        %v163 = vmul.f32 %v162, 1.442695
        %v164 = vpow.pop %v163
        %v165 = vsel %vm158, %v164, 0.0
        %166 = vadd.xlane.f32.xlu0 %v165
        %v167 = vpop.xlane.xlu0 %166
        %v168 = vlaneseq
        %v169 = vand.u32 %v168, 127
        %170 = vset.pattern.permute.xlu0 0
        %171 = vperm.xlu0 %170, %v157
        %v172 = vpop.permute.xlu0 %171
        %vm173 = vcmp.eq.s32.totalorder %v169, %v172
        %v174 = vsel %vm173, %v156, 0.0
        %v175 = vsel %vm158, %v174, 0.0
        %176 = vadd.xlane.f32.xlu0 %v175
        %v177 = vpop.xlane.xlu0 %176
        %v178 = vsel %vm173, %v164, 0.0
        %v179 = vsel %vm158, %v178, 0.0
        %180 = vadd.xlane.f32.xlu0 %v179
        %v181 = vpop.xlane.xlu0 %180
        %v182 = vlog2.pop %v167
        %v183 = vmul.f32 %v182, 0.6931472
        %v184 = vadd.f32 %v183, %v161
        %v185 = vsub.f32 %v184, %v177
        %v186 = vmax.f32 %v185, 0.0
        %v187 = vrcp.pop %v167
        %v188 = vmul.f32 %v167, %v187
        %v189 = vsub.f32 1.0, %v188
        %v190 = vmul.f32 %v187, %v189
        %v191 = vadd.f32 %v187, %v190
        %vm192 = vweird.f32 %v167
        %vm193 = vweird.f32 %v187
        %vm194 = vmor %vm192, %vm193
        %v195 = vsel %vm194, %v187, %v191
        %v196 = vand.u32 2147483647, %v167
        %vm197 = vcmp.eq.f32.partialorder %v196, 8.507059e+37
        %v198 = vand.u32 %v167, 2147483648
        %v199 = vor.u32 1.1754944e-38, %v198
        %v200 = vsel %vm197, %v199, %v195
        %v201 = vmul.f32 %v181, %v200
        %v202 = vsub.f32 1.0, %v201
        %v203 = vmul.f32 %v202, %v202
        %v204 = vlaneseq
        %v205 = vshrl.u32 %v204, 7
        %s206 = smul.u32 %s16, 8
        %v207 = vstv %s206
        %v208 = vadd.s32 %v205, %v207
        %vm209 = vcmp.lt.s32.totalorder %v208, 16
        %v210 = vmul.f32 %v203, %v186
        %v211 = vsel %vm209, %v210, 0.0
        %v212 = vrot.slane %v211, 4
        %v213 = vadd.f32 %v211, %v212
        %v214 = vrot.slane %v213, 2
        %v215 = vadd.f32 %v213, %v214
        %v216 = vrot.slane %v215, 1
        %v217 = vadd.f32 %v215, %v216
        %218 = vst [vmem:[%s147] sm:$0xff] %v217
        %s219 = sand.u32 %s76, 1
        %s220 = scalar_lea.sflag [#allocation3], %s219
        %s221 = sand.u32 %s76, 1
        %s222 = smul.addr %s221, 8
        %s223 = scalar_lea.vmem [#allocation2], %s222
        // Predicated region
        $region29: #{tpu_custom_call.1} parent=27 // pred_check
          %p224 = pneg %p86
        $region30: #{tpu_custom_call.1} parent=27 // pred_check_branch
          %226 = sbr.rel (%p224) target = $region32
        $region31: #{tpu_custom_call.1} parent=27 // pred_region
          %228 = vsyncadd %s220, 0
          %s229 = smul.addr %s16, 8
          %s230 = scalar_lea.hbm %s2, %s229
          %s232 = sshll.u32 %s223, 4
          %s233 = int_to_ptr.vmem [resolvable:$true] %s232
          %s234 = sshll.u32 %s230, 4
          %s235 = int_to_ptr.hbm [resolvable:$true] %s234
          %237 = dma.vmem_to_hbm [thread:$0]  %s233, 128, %s235, %s220
        $region32: #{tpu_custom_call.1} parent=27 // pred_fallthru
          _
      $region28: #{tpu_custom_call.1} parent=5 // pred_fallthru
        _
      %p238 = scmp.le.s32.totalorder 2, %s11
      // Predicated region
      $region33: #{tpu_custom_call.1} parent=5 // pred_check
        %p239 = pneg %p238
      $region34: #{tpu_custom_call.1} parent=5 // pred_check_branch
        %241 = sbr.rel (%p239) target = $region36
      $region35: #{tpu_custom_call.1} parent=5 // pred_region
        %s242 = ssub.s32 %s11, 2
        // Predicated region
        $region37: #{tpu_custom_call.1} parent=35 // pred_check
          %p243 = pneg %p92
        $region38: #{tpu_custom_call.1} parent=35 // pred_check_branch
          %245 = sbr.rel (%p243) target = $region40
        $region39: #{tpu_custom_call.1} parent=35 // pred_region
          %s246 = sand.u32 %s77, 1
          %s247 = scalar_lea.sflag [#allocation3], %s246
          %s248 = sand.u32 %s77, 1
          %s249 = smul.addr %s248, 8
          %s250 = scalar_lea.vmem [#allocation2], %s249
          %252 = dma.done %s247, 128
        $region40: #{tpu_custom_call.1} parent=35 // pred_fallthru
          _
      $region36: #{tpu_custom_call.1} parent=5 // pred_fallthru
        _
    $region6: #{tpu_custom_call.1} parent=1 // loop_footer
      %s15 = sadd.s32 1, %s11
    $region7: #{tpu_custom_call.1} parent=1 // loop_footer_branch
      %10 = sbr.rel target = $region3
    $region8: #{tpu_custom_call.1} parent=1 // loop_exit
      _
    %253 = vsyncpa [#allocation3], 1
    %s254 = scalar_lea.sflag [#allocation3], 1
    %255 = vsyncpa %s254, 1

</llo_original>
